<compile_context>
chip_gen: v5e
topology: v5e:2x2
jax: 0.10.0
libtpu: 0.0.40
codegen_flags: <defaults>
</compile_context>

<pallas_src>
import jax
import jax.numpy as jnp
from jax.experimental import pallas as pl
from jax.experimental.pallas import tpu as pltpu

_LANE = 128
_LANE_CAP = 8192                   # max slab / tile width in elements
_TILE_BYTE_CAP = 4 * 1024 * 1024   # per-tile bytes; 2 in + 2 out bufs = 16 MiB
_VMEM_LIMIT = 32 * 1024 * 1024     # safe on v5e/v6e (128 MiB) and v7x (64 MiB)


def _copy_kernel(x_ref, o_ref):
    # Identically-shaped VMEM tiles: pure unmasked vector load + store.
    o_ref[...] = x_ref[...]


def _sublane_base(itemsize: int) -> int:
    # Sub-32-bit dtypes pack along sublanes: a bf16 vreg is [16,128], int8 [32,128].
    return max(8, 32 // max(1, itemsize))


def _choose_lane_width(total: int, sublane_base: int):
    """Largest divisor of `total` that is a multiple of 128 and <= _LANE_CAP.

    Prefers a width whose row count (total // L) is a multiple of the sublane
    base, so every vreg is fully packed and every store is unmasked.
    Returns None when total is not a multiple of 128.
    """
    if total % _LANE != 0:
        return None
    best_any = None
    t = (min(_LANE_CAP, total) // _LANE) * _LANE
    while t >= _LANE:
        if total % t == 0:
            if best_any is None:
                best_any = t
            if (total // t) % sublane_base == 0:
                return t
        t -= _LANE
    return best_any


def _copy_slab(slab: jnp.ndarray, total_bytes: int) -> jnp.ndarray:
    """Tiled identity copy of a 2D slab through a Pallas kernel."""
    rows, cols = slab.shape
    itemsize = jnp.dtype(slab.dtype).itemsize
    sub = _sublane_base(itemsize)

    # Column tile: lane-dense multiple of 128 (or full extent when cols < 128).
    if cols % _LANE == 0 and cols <= _LANE_CAP:
        tile_cols = cols
    else:
        tile_cols = min(_LANE_CAP, (cols // _LANE) * _LANE)
        if tile_cols == 0:
            tile_cols = cols  # cols < 128: full extent is always legal

    # Row tile: multiple of the dtype's sublane base, sized against the byte cap.
    if rows < sub:
        tile_rows = rows      # full extent: always legal
    else:
        max_rows = max(sub, (_TILE_BYTE_CAP // (tile_cols * itemsize)) // sub * sub)
        if rows >= 2 * sub:
            # Leave >= 2 row steps so both v7x TensorCores receive work.
            max_rows = min(max_rows, max(sub, ((rows + 1) // 2) // sub * sub))
        tile_rows = min(max_rows, (rows // sub) * sub)

    grid = (pl.cdiv(rows, tile_rows), pl.cdiv(cols, tile_cols))

    return pl.pallas_call(
        _copy_kernel,
        out_shape=jax.ShapeDtypeStruct((rows, cols), slab.dtype),
        grid_spec=pl.GridSpec(
            grid=grid,
            in_specs=[pl.BlockSpec((tile_rows, tile_cols), lambda i, j: (i, j))],
            out_specs=pl.BlockSpec((tile_rows, tile_cols), lambda i, j: (i, j)),
        ),
        compiler_params=pltpu.CompilerParams(
            dimension_semantics=("parallel", "parallel"),
            vmem_limit_bytes=_VMEM_LIMIT,
        ),
        cost_estimate=pl.CostEstimate(
            flops=0, transcendentals=0, bytes_accessed=2 * total_bytes),
    )(slab)


def flatten_pallas(x: jnp.ndarray, batch: bool = True,
                   via_kernel: bool = True) -> jnp.ndarray:
    """Pallas implementation of lightnet Flatten.forward (any trailing dims).

    via_kernel=False returns the metadata-only reshape (zero HBM traffic) —
    the right choice when Flatten is not fused with adjacent compute.
    """
    n = x.shape[0]
    total = 1
    for d in x.shape:
        total *= d
    flat = total // max(n, 1)
    out_shape = (n, flat) if batch else (total,)

    if not via_kernel or total == 0:
        return x.reshape(out_shape)

    itemsize = jnp.dtype(x.dtype).itemsize
    sub = _sublane_base(itemsize)

    lane_w = _choose_lane_width(total, sub)
    if lane_w is not None:
        slab = x.reshape(total // lane_w, lane_w)   # metadata-only relayout
    elif total >= _LANE:
        slab = x.reshape(1, total)                  # lane-misaligned fallback
    else:
        # Fewer than 128 elements: the reshape already is the answer.
        return x.reshape(out_shape)

    out = _copy_slab(slab, total * itemsize)
    return out.reshape(out_shape)                   # metadata-only reshape


if __name__ == "__main__":
    key = jax.random.PRNGKey(0)
    # Small NCHW feature map: batch=2, channels=4, spatial=16x16.
    x = jax.random.normal(key, (2, 4, 16, 16), dtype=jnp.float32)

    # batch=True path (through the Pallas kernel)
    y = flatten_pallas(x, batch=True)
    y = jax.block_until_ready(y)
    assert y.shape == (2, 4 * 16 * 16), y.shape
    assert jnp.array_equal(y, x.reshape(x.shape[0], -1))

    # batch=False path (through the Pallas kernel)
    y_flat = flatten_pallas(x, batch=False)
    y_flat = jax.block_until_ready(y_flat)
    assert y_flat.shape == (2 * 4 * 16 * 16,), y_flat.shape
    assert jnp.array_equal(y_flat, x.reshape(-1))

    # Bypass (metadata-only) path, per perf review: zero HBM traffic.
    y_fast = jax.block_until_ready(flatten_pallas(x, batch=True, via_kernel=False))
    assert jnp.array_equal(y_fast, y)

    print("KERNEL_OK")
</pallas_src>

<mosaic_0001>
module attributes {stable_mosaic.version = 11 : i64} {
  func.func @_copy_kernel(%arg0: i32, %arg1: i32, %arg2: memref<8x256xf32, #tpu.memory_space<vmem>>, %arg3: memref<8x256xf32, #tpu.memory_space<vmem>>) attributes {dimension_semantics = [#tpu.dimension_semantics<parallel>, #tpu.dimension_semantics<parallel>], iteration_bounds = array<i64: 1, 1>, scalar_prefetch = 0 : i64, scratch_operands = 0 : i64, tpu.core_type = #tpu.core_type<tc>, window_params = [{transform_indices = @transform_0, window_bounds = array<i64: 8, 256>}, {transform_indices = @transform_1, window_bounds = array<i64: 8, 256>}]} {
    %c0 = arith.constant 0 : index
    %c0_0 = arith.constant 0 : index
    %0 = vector.load %arg2[%c0, %c0_0] : memref<8x256xf32, #tpu.memory_space<vmem>>, vector<8x256xf32>
    %c0_1 = arith.constant 0 : index
    %c0_2 = arith.constant 0 : index
    %1 = vector.load %arg3[%c0_1, %c0_2] : memref<8x256xf32, #tpu.memory_space<vmem>>, vector<8x256xf32>
    tpu.vector_store %arg3[%c0_1, %c0_2], %0 {strides = array<i32>} : memref<8x256xf32, #tpu.memory_space<vmem>>, vector<8x256xf32>,
    return
  }
  func.func @transform_0(%arg0: i32, %arg1: i32) -> (i32, i32) {
    %c0_i32 = arith.constant 0 : i32
    return %arg0, %arg1 : i32, i32
  }
  func.func @transform_1(%arg0: i32, %arg1: i32) -> (i32, i32) {
    %c0_i32 = arith.constant 0 : i32
    return %arg0, %arg1 : i32, i32
  }
}

</mosaic_0001>

<llo_original>
// kernel: tpu_custom_call.1
$region0: #{tpu_custom_call.1}
  #allocation0 [shape = 'u32[]', space=smem, size = 0x4, offset = 0x4, fixed_abs, tag = 'smem constant byte address 0x4 - core index']
  #allocation1 [shape = 'u32[72,128]{1,0:T(1,128)}', space=vmem, size = 0x9000, scoped, tag = 'internal scratch']
  %s0 = inlined_call_operand.hbm [shape: f32[8,256], index: 0, kind: input, shape index: {}]
  %s1 = inlined_call_operand.hbm [shape: f32[8,256], index: 1, kind: output, shape index: {}]
  %s2 = sld [smem:[#allocation0]]
  $region18: #{tpu_custom_call.1} parent=0
    _
  %s4 = ssub.s32 1, %s2
  %s5 = scalar_select 0, %s4, %s2
  $region1: #{tpu_custom_call.1} parent=0
    #allocation2 [shape = 'u8[8192]{0}', space=vmem, size = 0x2000, scoped, tag = 'input window, operand 0, single buffered']
    #allocation3 [shape = 's32[1]{0}', space=sflag, size = 0x4, scoped, tag = 'scoped memory for tpu_custom_call.1']
    #allocation4 [shape = 's32[1]{0}', space=sflag, size = 0x4, scoped, tag = 'scoped memory for tpu_custom_call.1']
    #allocation5 [shape = 'u8[8192]{0}', space=vmem, size = 0x2000, scoped, tag = 'output window, operand 0, single buffered']
    %6 = vsyncpa [#allocation3], 0
    %7 = vsyncpa [#allocation4], 0
    // Predicated region
    $region2: #{tpu_custom_call.1} parent=1 // pred_check
      _
    $region3: #{tpu_custom_call.1} parent=1 // pred_check_branch
      %9 = sbr.rel (0) target = $region5
    $region4: #{tpu_custom_call.1} parent=1 // pred_region
      %11 = vsyncadd [#allocation3], 0
      %s13 = sshll.u32 %s0, 4
      %s14 = int_to_ptr.hbm [resolvable:$true] %s13
      %s15 = sshll.u32 [#allocation2], 4
      %s16 = int_to_ptr.vmem [resolvable:$true] %s15
      %18 = dma.hbm_to_vmem [thread:$0]  %s14, 256, %s16, [#allocation3]
    $region5: #{tpu_custom_call.1} parent=1 // pred_fallthru
      _
    // Predicated region
    $region6: #{tpu_custom_call.1} parent=1 // pred_check
      _
    $region7: #{tpu_custom_call.1} parent=1 // pred_check_branch
      %20 = sbr.rel (0) target = $region9
    $region8: #{tpu_custom_call.1} parent=1 // pred_region
      %22 = dma.done [#allocation3], 256
    $region9: #{tpu_custom_call.1} parent=1 // pred_fallthru
      _
    %v23 = vld [vmem:[#allocation2] sm:$0xff]
    %v24 = vld [vmem:[#allocation2 + $0x8] sm:$0xff]
    %25 = vst [vmem:[#allocation5] sm:$0xff] %v23
    %26 = vst [vmem:[#allocation5 + $0x8] sm:$0xff] %v24
    // Predicated region
    $region10: #{tpu_custom_call.1} parent=1 // pred_check
      _
    $region11: #{tpu_custom_call.1} parent=1 // pred_check_branch
      %28 = sbr.rel (0) target = $region13
    $region12: #{tpu_custom_call.1} parent=1 // pred_region
      %30 = vsyncadd [#allocation4], 0
      %s32 = sshll.u32 [#allocation5], 4
      %s33 = int_to_ptr.vmem [resolvable:$true] %s32
      %s34 = sshll.u32 %s1, 4
      %s35 = int_to_ptr.hbm [resolvable:$true] %s34
      %37 = dma.vmem_to_hbm [thread:$0]  %s33, 256, %s35, [#allocation4]
    $region13: #{tpu_custom_call.1} parent=1 // pred_fallthru
      _
    // Predicated region
    $region14: #{tpu_custom_call.1} parent=1 // pred_check
      _
    $region15: #{tpu_custom_call.1} parent=1 // pred_check_branch
      %39 = sbr.rel (0) target = $region17
    $region16: #{tpu_custom_call.1} parent=1 // pred_region
      %41 = dma.done [#allocation4], 256
    $region17: #{tpu_custom_call.1} parent=1 // pred_fallthru
      _
    %42 = vsyncpa [#allocation3], 1
    %43 = vsyncpa [#allocation4], 1

</llo_original>
